<compile_context>
chip_gen: v5e
topology: v5e:2x2
jax: 0.10.0
libtpu: 0.0.40
codegen_flags: <defaults>
</compile_context>

<pallas_src>
import functools

import jax
import jax.numpy as jnp
from jax.experimental import pallas as pl
from jax.experimental.pallas import tpu as pltpu

CPAD = 128   # lane-dense channel padding (one MXU contraction tile)
KTAPS = 27   # 3x3x3 conv taps


def _round_up(x, m):
    return (x + m - 1) // m * m


def _tree_sum(xs):
    xs = list(xs)
    while len(xs) > 1:
        nxt = [xs[i] + xs[i + 1] for i in range(0, len(xs) - 1, 2)]
        if len(xs) % 2:
            nxt.append(xs[-1])
        xs = nxt
    return xs[0]


def _geometry(D, H, W):
    """Row layout of the flattened, padded activation volume."""
    Hp = H + 2
    Wpp = _round_up(W + 2, 8)        # sublane-aligned padded row length
    HpW = Hp * Wpp                   # depth-plane stride (multiple of 8)
    Pin = D * HpW                    # interior-depth rows computed / stored
    base = _round_up(Wpp + 1, 8)     # margin rows before the padded volume
    row0 = base + HpW                # first interior-depth row inside act_scr
    R = 2 * base + (D + 2) * HpW     # total act_scr rows
    return Hp, Wpp, HpW, Pin, base, row0, R


def probe_roll_forward():
    """True if pltpu.roll(x, s, axis) moves lane i -> lane i+s (np.roll convention)."""
    def k(x_ref, o_ref):
        o_ref[...] = pltpu.roll(x_ref[...], 1, 1)

    x = jnp.zeros((8, 128), jnp.float32).at[:, 0].set(1.0)
    y = pl.pallas_call(k, out_shape=jax.ShapeDtypeStruct((8, 128), jnp.float32))(x)
    return bool(y[0, 1] == 1.0)


# ---------------------------------------------------------------------------
# Fused kernel factory
# ---------------------------------------------------------------------------
def _make_fused_kernel(conv_cis, n_res, D, H, W, cpad, roll_forward):
    n_conv = len(conv_cis)
    assert n_conv == 2 + 2 * n_res
    Hp, Wpp, HpW, Pin, base, row0, R = _geometry(D, H, W)

    tap_off = []
    for t in range(KTAPS):
        kd, kh, kw = t // 9, (t // 3) % 3, t % 3
        tap_off.append((kd - 1) * HpW + (kh - 1) * Wpp + (kw - 1))

    def silu(v):
        return v * jax.nn.sigmoid(v)

    def kernel(x_hbm, imask_ref, *rest):
        sem = rest[-1]        # DMA semaphore
        act_scr = rest[-2]    # (R, cpad) f32 activation scratch (with halos)
        o_ref = rest[-3]      # (Pin, cpad) output block for this sample
        wb = rest[:-3]        # w0, b0, w1, b1, ...  (packed, lane-dense)

        n = pl.program_id(0)

        # DMA this sample's interior-depth slab straight into the activation
        # scratch: no double-buffered x block, no extra VMEM->VMEM copy pass.
        cp = pltpu.make_async_copy(x_hbm.at[n], act_scr.at[pl.ds(row0, Pin)], sem)
        cp.start()

        # Zero only the halo/margin rows (depth-halo planes + slack), every step:
        # the interior rows are fully rewritten by the DMA / set_act, and doing it
        # unconditionally stays correct when the "parallel" batch axis is split
        # across TensorCores (each core owns a fresh scratch instance).
        zrows = base + HpW
        act_scr[pl.ds(0, zrows), :] = jnp.zeros((zrows, cpad), jnp.float32)
        act_scr[pl.ds(base + (D + 1) * HpW, zrows), :] = jnp.zeros(
            (zrows, cpad), jnp.float32)

        cp.wait()

        # Interior mask: 1.0 on real voxels, 0.0 on h/w halo rows (broadcast hoisted
        # out of the per-layer uses).
        mask = jnp.broadcast_to(imask_ref[...], (Pin, cpad))

        def conv(w_ref, b_ref, ci):
            # 3x3x3 'same' conv with the taps packed into the MXU contraction dim.
            # Each 128-lane group carries tpg = cpad // ci taps: the shifted
            # activations (whose lanes >= ci are guaranteed zero) are lane-rolled
            # into disjoint slots and summed (exact, non-overlapping lanes), then a
            # single (Pin,128) @ (128,128) bf16 matmul per group runs on the MXU
            # with f32 accumulation.
            tpg = max(1, cpad // ci)
            ngroups = -(-KTAPS // tpg)
            acc = jnp.zeros((Pin, cpad), jnp.float32)
            for g in range(ngroups):
                parts = []
                for k in range(tpg):
                    t = g * tpg + k
                    if t >= KTAPS:
                        break
                    v = act_scr[pl.ds(row0 + tap_off[t], Pin), :]
                    if k:
                        shift = k * ci if roll_forward else cpad - k * ci
                        v = pltpu.roll(v, shift, 1)
                    parts.append(v)
                packed = _tree_sum(parts).astype(jnp.bfloat16)
                acc = acc + jnp.dot(packed, w_ref[g],
                                    preferred_element_type=jnp.float32)
            return acc + b_ref[...]

        def set_act(a):
            act_scr[pl.ds(row0, Pin), :] = a

        # Conv3d(in_ch -> hidden) + SiLU
        a = silu(conv(wb[0], wb[1], conv_cis[0])) * mask
        set_act(a)
        idx = 2

        # Residual blocks: x + SiLU(Conv(SiLU(Conv(x))))
        # TODO(synk): ResidualBlock3D internals are assumed (the (hidden, hidden, 2, 2)
        #   constructor args are unexplained); the JAX reference mirrors the same assumption.
        for _ in range(n_res):
            skip = a
            a = silu(conv(wb[idx], wb[idx + 1], conv_cis[idx // 2])) * mask
            set_act(a)
            idx += 2
            a = silu(conv(wb[idx], wb[idx + 1], conv_cis[idx // 2])) * mask + skip
            set_act(a)
            idx += 2

        # Final Conv3d(hidden -> out_ch), no activation (junk halo rows sliced off
        # in the wrapper).
        o_ref[...] = conv(wb[idx], wb[idx + 1], conv_cis[idx // 2]).astype(o_ref.dtype)

    return kernel, Pin, Wpp, R


# ---------------------------------------------------------------------------
# One-time (hoisted) parameter / constant preparation
# ---------------------------------------------------------------------------
def init_params(key, in_ch, out_ch, hidden, num_res_block, dtype=jnp.float32):
    """PyTorch-style Conv3d params: list of (weight (O, I, 3, 3, 3), bias (O,))."""
    chans = [(in_ch, hidden)]
    for _ in range(num_res_block):
        chans += [(hidden, hidden), (hidden, hidden)]
    chans.append((hidden, out_ch))
    params = []
    for ci, co in chans:
        key, k_w, k_b = jax.random.split(key, 3)
        bound = 1.0 / (ci * 27) ** 0.5
        w = jax.random.uniform(k_w, (co, ci, 3, 3, 3), dtype, -bound, bound)
        b = jax.random.uniform(k_b, (co,), dtype, -bound, bound)
        params.append((w, b))
    return params


def prepare_packed_params(params, cpad=CPAD):
    """Repack (O, I, 3, 3, 3) conv weights into tap-grouped bf16 (G, cpad, cpad) tiles.

    Contraction lane (k*ci + c) of group g holds weight[tap = g*tpg + k, c, :].
    """
    packed = []
    for w, b in params:
        co, ci = int(w.shape[0]), int(w.shape[1])
        assert ci <= cpad and co <= cpad
        tpg = max(1, cpad // ci)
        ngroups = -(-KTAPS // tpg)
        wt = jnp.transpose(w, (2, 3, 4, 1, 0)).reshape(KTAPS, ci, co)  # (tap, I, O)
        wp = jnp.zeros((ngroups, cpad, cpad), jnp.float32)
        for t in range(KTAPS):
            g, k = t // tpg, t % tpg
            wp = wp.at[g, k * ci:(k + 1) * ci, :co].set(wt[t])
        packed.append(wp.astype(jnp.bfloat16))
        packed.append(jnp.zeros((1, cpad), jnp.float32).at[0, :co].set(
            b.astype(jnp.float32)))
    return packed


def make_interior_mask(D, H, W, dtype=jnp.float32):
    """(Pin, 1): 1.0 on real voxels of the interior-depth rows, 0.0 on h/w halo rows."""
    _, Wpp, _, Pin, _, _, _ = _geometry(D, H, W)
    m = jnp.zeros((D, H + 2, Wpp), dtype).at[:, 1:H + 1, 1:W + 1].set(1.0)
    return m.reshape(Pin, 1)


# ---------------------------------------------------------------------------
# Wrapper around the fused pallas_call
# ---------------------------------------------------------------------------
def one_step_solve3d_pallas(x, packed_params, interior_mask, *, conv_cis, out_ch,
                            roll_forward=True, cpad=CPAD):
    """x: (N, in_ch, D, H, W) float32 (PyTorch NCDHW). Returns (N, out_ch, D, H, W)."""
    N, cin, D, H, W = x.shape
    n_conv = len(packed_params) // 2
    n_res = (n_conv - 2) // 2
    assert len(conv_cis) == n_conv and conv_cis[0] == cin
    kernel, Pin, Wpp, R = _make_fused_kernel(conv_cis, n_res, D, H, W, cpad,
                                             roll_forward)
    Hp = H + 2

    # NCDHW -> channels-last (lanes), interior depth planes only, zero h/w halo,
    # w right-padded so each row spans a whole number of 8-sublane groups,
    # channels zero-padded to cpad lanes.
    xc = jnp.transpose(x, (0, 2, 3, 4, 1))
    xp = jnp.pad(xc, ((0, 0), (0, 0), (1, 1), (1, Wpp - W - 1), (0, cpad - cin)))
    x_flat = xp.reshape(N, Pin, cpad).astype(jnp.float32)

    in_specs = [
        pl.BlockSpec(memory_space=pl.ANY),           # x stays in HBM; DMA'd manually
        pl.BlockSpec((Pin, 1), lambda n: (0, 0)),    # interior mask (resident)
    ]
    for i in range(n_conv):
        G = packed_params[2 * i].shape[0]
        in_specs.append(pl.BlockSpec((G, cpad, cpad), lambda n: (0, 0, 0)))  # weights
        in_specs.append(pl.BlockSpec((1, cpad), lambda n: (0, 0)))           # bias

    # VMEM budget derived from actual residency (act scratch + double-buffered output
    # block + resident weights/mask) plus headroom, instead of a hard-coded limit.
    wgt_bytes = sum(
        2 * (packed_params[2 * i].shape[0] * cpad * cpad * 2 + cpad * 4)
        for i in range(n_conv))
    est = R * cpad * 4 + 2 * Pin * cpad * 4 + 2 * Pin * 4 + wgt_bytes
    vmem_limit = max(32 << 20, min(int(est * 1.25) + (4 << 20), 120 << 20))
    # TODO(synk): for volumes where `est` approaches device VMEM (v7x: 64 MiB), add a
    #   depth-slab grid axis with per-layer halo recompute instead of whole-volume residency.

    out = pl.pallas_call(
        kernel,
        out_shape=jax.ShapeDtypeStruct((N, Pin, cpad), jnp.float32),
        grid=(N,),
        in_specs=in_specs,
        out_specs=pl.BlockSpec((None, Pin, cpad), lambda n: (n, 0, 0)),
        scratch_shapes=[pltpu.VMEM((R, cpad), jnp.float32),
                        pltpu.SemaphoreType.DMA],
        compiler_params=pltpu.CompilerParams(
            dimension_semantics=("parallel",),
            vmem_limit_bytes=vmem_limit,
        ),
    )(x_flat, interior_mask, *packed_params)

    # Un-flatten, drop h/w halo rows, width padding and channel padding; back to NCDHW.
    y = out.reshape(N, D, Hp, Wpp, cpad)[:, :, 1:H + 1, 1:W + 1, :out_ch]
    return jnp.transpose(y, (0, 4, 1, 2, 3))


# ---------------------------------------------------------------------------
# Pure-JAX reference (mirrors the PyTorch module, NCDHW, PyTorch-style params)
# ---------------------------------------------------------------------------
def one_step_solve3d_ref(x, params):
    dn = ('NCDHW', 'OIDHW', 'NCDHW')

    def conv(v, w, b):
        y = jax.lax.conv_general_dilated(
            v, w, window_strides=(1, 1, 1), padding='SAME',
            dimension_numbers=dn, precision=jax.lax.Precision.HIGHEST)
        return y + b[None, :, None, None, None]

    def silu(v):
        return v * jax.nn.sigmoid(v)

    n_res = (len(params) - 2) // 2
    h = silu(conv(x, *params[0]))
    i = 1
    for _ in range(n_res):
        skip = h
        h = silu(conv(h, *params[i])); i += 1
        h = silu(conv(h, *params[i])); i += 1
        h = h + skip
    return conv(h, *params[i])


if __name__ == "__main__":
    key = jax.random.PRNGKey(0)
    N, in_ch, out_ch = 2, 4, 4
    hidden, num_res_block = 16, 1
    D, H, W = 4, 8, 8

    key, kx = jax.random.split(key)
    x = jax.random.normal(kx, (N, in_ch, D, H, W), jnp.float32)
    params = init_params(key, in_ch, out_ch, hidden, num_res_block)

    # One-time prep (hoisted out of the per-call path).
    conv_cis = tuple([in_ch] + [hidden] * (2 * num_res_block + 1))
    packed = prepare_packed_params(params)
    imask = make_interior_mask(D, H, W)
    roll_fwd = probe_roll_forward()   # pin down pltpu.roll's lane-shift convention

    fwd = jax.jit(functools.partial(one_step_solve3d_pallas,
                                    conv_cis=conv_cis, out_ch=out_ch,
                                    roll_forward=roll_fwd))
    out = jax.block_until_ready(fwd(x, packed, imask))

    ref = one_step_solve3d_ref(x, params)
    assert out.shape == ref.shape == (N, out_ch, D, H, W), (out.shape, ref.shape)
    max_err = float(jnp.max(jnp.abs(out - ref)))
    assert jnp.allclose(out, ref, atol=1e-2, rtol=1e-2), f"max abs err {max_err}"
    print("KERNEL_OK")
</pallas_src>

<mosaic_0001>
module attributes {stable_mosaic.version = 11 : i64} {
  func.func @k(%arg0: memref<8x128xf32, #tpu.memory_space<vmem>>, %arg1: memref<8x128xf32, #tpu.memory_space<vmem>>) attributes {dimension_semantics = [], scalar_prefetch = 0 : i64, scratch_operands = 0 : i64, tpu.core_type = #tpu.core_type<tc>} {
    %c0 = arith.constant 0 : index
    %c0_0 = arith.constant 0 : index
    %0 = vector.load %arg0[%c0, %c0_0] : memref<8x128xf32, #tpu.memory_space<vmem>>, vector<8x128xf32>
    %c1_i32 = arith.constant 1 : i32
    %1 = tpu.dynamic_rotate %0 by %c1_i32 dim 1 : vector<8x128xf32>, i32 -> vector<8x128xf32>
    %c0_1 = arith.constant 0 : index
    %c0_2 = arith.constant 0 : index
    %2 = vector.load %arg1[%c0_1, %c0_2] : memref<8x128xf32, #tpu.memory_space<vmem>>, vector<8x128xf32>
    tpu.vector_store %arg1[%c0_1, %c0_2], %1 {strides = array<i32>} : memref<8x128xf32, #tpu.memory_space<vmem>>, vector<8x128xf32>,
    return
  }
}

</mosaic_0001>

<llo_original>
// kernel: tpu_custom_call.1
$region0: #{tpu_custom_call.1}
  #allocation0 [shape = 'u32[]', space=smem, size = 0x4, offset = 0x4, fixed_abs, tag = 'smem constant byte address 0x4 - core index']
  #allocation1 [shape = 'u32[72,128]{1,0:T(1,128)}', space=vmem, size = 0x9000, scoped, tag = 'internal scratch']
  %s0 = inlined_call_operand.hbm [shape: f32[8,128], index: 0, kind: input, shape index: {}]
  %s1 = inlined_call_operand.hbm [shape: f32[8,128], index: 1, kind: output, shape index: {}]
  %s2 = sld [smem:[#allocation0]]
  $region18: #{tpu_custom_call.1} parent=0
    _
  %s4 = ssub.s32 1, %s2
  %s5 = scalar_select 0, %s4, %s2
  $region1: #{tpu_custom_call.1} parent=0
    #allocation2 [shape = 'u8[4096]{0}', space=vmem, size = 0x1000, scoped, tag = 'input window, operand 0, single buffered']
    #allocation3 [shape = 's32[1]{0}', space=sflag, size = 0x4, scoped, tag = 'scoped memory for tpu_custom_call.1']
    #allocation4 [shape = 's32[1]{0}', space=sflag, size = 0x4, scoped, tag = 'scoped memory for tpu_custom_call.1']
    #allocation5 [shape = 'u8[4096]{0}', space=vmem, size = 0x1000, scoped, tag = 'output window, operand 0, single buffered']
    %6 = vsyncpa [#allocation3], 0
    %7 = vsyncpa [#allocation4], 0
    // Predicated region
    $region2: #{tpu_custom_call.1} parent=1 // pred_check
      _
    $region3: #{tpu_custom_call.1} parent=1 // pred_check_branch
      %9 = sbr.rel (0) target = $region5
    $region4: #{tpu_custom_call.1} parent=1 // pred_region
      %11 = vsyncadd [#allocation3], 0
      %s13 = sshll.u32 %s0, 4
      %s14 = int_to_ptr.hbm [resolvable:$true] %s13
      %s15 = sshll.u32 [#allocation2], 4
      %s16 = int_to_ptr.vmem [resolvable:$true] %s15
      %18 = dma.hbm_to_vmem [thread:$0]  %s14, 128, %s16, [#allocation3]
    $region5: #{tpu_custom_call.1} parent=1 // pred_fallthru
      _
    // Predicated region
    $region6: #{tpu_custom_call.1} parent=1 // pred_check
      _
    $region7: #{tpu_custom_call.1} parent=1 // pred_check_branch
      %20 = sbr.rel (0) target = $region9
    $region8: #{tpu_custom_call.1} parent=1 // pred_region
      %22 = dma.done [#allocation3], 128
    $region9: #{tpu_custom_call.1} parent=1 // pred_fallthru
      _
    %v23 = vld [vmem:[#allocation2] sm:$0xff]
    %24 = vrot.lane.b32.xlu0 %v23, 1
    %v25 = vpop.permute.xlu0 %24
    %26 = vst [vmem:[#allocation5] sm:$0xff] %v25
    // Predicated region
    $region10: #{tpu_custom_call.1} parent=1 // pred_check
      _
    $region11: #{tpu_custom_call.1} parent=1 // pred_check_branch
      %28 = sbr.rel (0) target = $region13
    $region12: #{tpu_custom_call.1} parent=1 // pred_region
      %30 = vsyncadd [#allocation4], 0
      %s32 = sshll.u32 [#allocation5], 4
      %s33 = int_to_ptr.vmem [resolvable:$true] %s32
      %s34 = sshll.u32 %s1, 4
      %s35 = int_to_ptr.hbm [resolvable:$true] %s34
      %37 = dma.vmem_to_hbm [thread:$0]  %s33, 128, %s35, [#allocation4]
    $region13: #{tpu_custom_call.1} parent=1 // pred_fallthru
      _
    // Predicated region
    $region14: #{tpu_custom_call.1} parent=1 // pred_check
      _
    $region15: #{tpu_custom_call.1} parent=1 // pred_check_branch
      %39 = sbr.rel (0) target = $region17
    $region16: #{tpu_custom_call.1} parent=1 // pred_region
      %41 = dma.done [#allocation4], 128
    $region17: #{tpu_custom_call.1} parent=1 // pred_fallthru
      _
    %42 = vsyncpa [#allocation3], 1
    %43 = vsyncpa [#allocation4], 1

</llo_original>
